<compile_context>
chip_gen: v7x
topology: tpu7x:2x2x1
jax: 0.10.0
libtpu: 0.0.40
codegen_flags: <defaults>
</compile_context>

<pallas_src>
import functools
import math

import jax
import jax.numpy as jnp
from jax.experimental import pallas as pl
from jax.experimental.pallas import tpu as pltpu


def _make_divisible(v, divisor, min_value=None):
    if min_value is None:
        min_value = divisor
    new_v = max(min_value, int(v + divisor / 2) // divisor * divisor)
    if new_v < 0.9 * v:
        new_v += divisor
    return new_v


def _round_up(x, m):
    return ((x + m - 1) // m) * m


def _vmem_budget_bytes():
    # v5e/v6e have 128 MiB VMEM per core -> spend up to ~96 MiB on pipeline
    # buffers; v7x (64 MiB/TC) and unknown parts get a conservative ~40 MiB so
    # the chosen blocks are guaranteed to fit.
    kind = ""
    try:
        kind = jax.devices()[0].device_kind.lower()
    except Exception:
        pass
    if "v5" in kind or "v6" in kind:
        return 96 << 20
    return 40 << 20


def _choose_bt(B, slab_bytes, weight_bytes, budget):
    """Largest Bt dividing B whose 2x(in)+2x(out) buffers + resident weights fit
    the VMEM budget, while keeping >= 2 grid steps (v7x megacore)."""
    slack = 2 << 20
    best = 0
    for cand in range(1, B + 1):
        if B % cand:
            continue
        need = 4 * cand * slab_bytes + 2 * weight_bytes + slack
        if need > budget:
            break
        if B >= 2 and B // cand < 2:
            break
        best = cand
    return best


def _choose_hw_tile(C, HW, weight_bytes, budget):
    """HW tile (multiple of 128) for the two-phase fallback."""
    slack = 2 << 20
    per_col = 4 * C * 4                      # 2 in + 2 out f32 buffers per column
    max_cols = max((budget - 2 * weight_bytes - slack) // per_col, 128)
    thw = max((max_cols // 128) * 128, 128)
    return int(min(thw, _round_up(HW, 128)))


# ----------------------------- single-pass path -----------------------------
def _se_kernel(x_ref, w1_ref, b1_ref, w2_ref, b2_ref, o_ref, *, inv_hw):
    # x_ref/o_ref: (Bt, C, HW)   w1: (C, hidden)  b1: (1, hidden)
    # w2: (hidden, C)            b2: (1, C)
    x = x_ref[...]                                            # (Bt, C, HW)

    # Squeeze: lane-axis sum + one scale by 1/HW on the tiny (Bt, C) result.
    y = jnp.sum(x, axis=-1) * inv_hw                          # (Bt, C)

    # Excite: Linear -> ReLU6 -> Linear -> Sigmoid (M = Bt on the MXU).
    h = jnp.dot(y, w1_ref[...], preferred_element_type=jnp.float32) + b1_ref[...]
    h = jnp.clip(h, 0.0, 6.0)
    s = jnp.dot(h, w2_ref[...], preferred_element_type=jnp.float32) + b2_ref[...]
    s = jax.nn.sigmoid(s)                                     # (Bt, C)

    # Scale: broadcast the per-channel gate over the spatial (lane) axis.
    o_ref[...] = x * s[:, :, None]


def _single_pass(x_flat, w1, b1_2d, w2, b2_2d, Bt, weight_bytes):
    B, C, HW = x_flat.shape
    hidden = w1.shape[1]
    inv_hw = 1.0 / float(HW)
    slab_bytes = C * HW * 4
    need = 4 * Bt * slab_bytes + 2 * weight_bytes + (2 << 20)
    vmem_limit = int(max(need, 16 << 20))

    cost = pl.CostEstimate(
        flops=2 * B * C * HW + 4 * B * C * hidden,   # squeeze sum + gate mult + 2 matmuls
        transcendentals=B * C,                       # sigmoid
        bytes_accessed=2 * B * C * HW * 4 + weight_bytes,
    )
    kernel = functools.partial(_se_kernel, inv_hw=inv_hw)

    def call(single_buffer_weights):
        wkw = dict(pipeline_mode=pl.Buffered(1)) if single_buffer_weights else {}
        return pl.pallas_call(
            kernel,
            out_shape=jax.ShapeDtypeStruct((B, C, HW), jnp.float32),
            grid=(B // Bt,),
            in_specs=[
                pl.BlockSpec((Bt, C, HW), lambda b: (b, 0, 0)),   # x: Bt batch slab
                pl.BlockSpec((C, hidden), lambda b: (0, 0), **wkw),  # w1 resident
                pl.BlockSpec((1, hidden), lambda b: (0, 0), **wkw),  # b1 resident
                pl.BlockSpec((hidden, C), lambda b: (0, 0), **wkw),  # w2 resident
                pl.BlockSpec((1, C), lambda b: (0, 0), **wkw),       # b2 resident
            ],
            out_specs=pl.BlockSpec((Bt, C, HW), lambda b: (b, 0, 0)),
            compiler_params=pltpu.CompilerParams(
                dimension_semantics=("parallel",),     # megacore on v7x
                vmem_limit_bytes=vmem_limit,
            ),
            cost_estimate=cost,
        )(x_flat, w1, b1_2d, w2, b2_2d)

    try:
        return call(True)
    except Exception:
        # pipeline_mode=pl.Buffered(1) unsupported on this Mosaic build; fall
        # back to default double-buffered weight specs (tiny VMEM cost).
        return call(False)


# -------------------- two-phase fallback (oversized slabs) -------------------
def _se_gate_kernel(x_ref, w1_ref, b1_ref, w2_ref, b2_ref, gate_ref,
                    *, inv_hw, hw, thw):
    # x_ref: (1, C, thw)   gate_ref: (1, C, 1)  (resident across the hw axis)
    h_idx = pl.program_id(1)

    @pl.when(h_idx == 0)
    def _():
        gate_ref[...] = jnp.zeros_like(gate_ref)

    x = x_ref[...]
    # Mask the ragged last tile: out-of-bounds lanes are not guaranteed zero.
    col = jax.lax.broadcasted_iota(jnp.int32, x.shape, 2) + h_idx * thw
    x = jnp.where(col < hw, x, 0.0)
    gate_ref[...] += jnp.sum(x, axis=-1, keepdims=True)       # (1, C, 1)

    @pl.when(h_idx == pl.num_programs(1) - 1)
    def _():
        y = gate_ref[...][:, :, 0] * inv_hw                    # (1, C)
        t = jnp.dot(y, w1_ref[...], preferred_element_type=jnp.float32) + b1_ref[...]
        t = jnp.clip(t, 0.0, 6.0)
        s = jnp.dot(t, w2_ref[...], preferred_element_type=jnp.float32) + b2_ref[...]
        gate_ref[...] = jax.nn.sigmoid(s)[:, :, None]


def _se_scale_kernel(x_ref, gate_ref, o_ref):
    # x_ref/o_ref: (1, C, thw)   gate_ref: (1, C, 1)
    o_ref[...] = x_ref[...] * gate_ref[...]


def _two_phase(x_flat, w1, b1_2d, w2, b2_2d, thw, weight_bytes):
    B, C, HW = x_flat.shape
    hidden = w1.shape[1]
    inv_hw = 1.0 / float(HW)
    nhw = pl.cdiv(HW, thw)
    tile_bytes = C * thw * 4

    gate_kernel = functools.partial(_se_gate_kernel, inv_hw=inv_hw, hw=HW, thw=thw)
    gate = pl.pallas_call(
        gate_kernel,
        out_shape=jax.ShapeDtypeStruct((B, C, 1), jnp.float32),
        grid=(B, nhw),
        in_specs=[
            pl.BlockSpec((1, C, thw), lambda b, h: (b, 0, h)),
            pl.BlockSpec((C, hidden), lambda b, h: (0, 0)),
            pl.BlockSpec((1, hidden), lambda b, h: (0, 0)),
            pl.BlockSpec((hidden, C), lambda b, h: (0, 0)),
            pl.BlockSpec((1, C), lambda b, h: (0, 0)),
        ],
        out_specs=pl.BlockSpec((1, C, 1), lambda b, h: (b, 0, 0)),
        compiler_params=pltpu.CompilerParams(
            dimension_semantics=("parallel", "arbitrary"),
            vmem_limit_bytes=int(
                max(2 * tile_bytes + 2 * weight_bytes + (2 << 20), 16 << 20)),
        ),
    )(x_flat, w1, b1_2d, w2, b2_2d)

    out = pl.pallas_call(
        _se_scale_kernel,
        out_shape=jax.ShapeDtypeStruct((B, C, HW), jnp.float32),
        grid=(B, nhw),
        in_specs=[
            pl.BlockSpec((1, C, thw), lambda b, h: (b, 0, h)),
            pl.BlockSpec((1, C, 1), lambda b, h: (b, 0, 0)),
        ],
        out_specs=pl.BlockSpec((1, C, thw), lambda b, h: (b, 0, h)),
        compiler_params=pltpu.CompilerParams(
            dimension_semantics=("parallel", "parallel"),
            vmem_limit_bytes=int(max(4 * tile_bytes + (2 << 20), 16 << 20)),
        ),
    )(x_flat, gate)
    return out


# ---------------------------------- wrapper ----------------------------------
def se_layer(x_nchw, w1, b1, w2, b2, *, force_two_phase=False, force_hw_tile=None):
    """SELayer forward. x_nchw: (B, C, H, W) f32 -> (B, C, H, W) f32."""
    B, C, H, W = x_nchw.shape
    HW = H * W
    hidden = w1.shape[1]

    # No host-side padding or output slicing: x is read once, out written once.
    x_flat = x_nchw.reshape(B, C, HW)
    b1_2d = b1.reshape(1, hidden)
    b2_2d = b2.reshape(1, C)

    weight_bytes = (C * hidden + hidden + hidden * C + C) * 4
    budget = _vmem_budget_bytes()
    slab_bytes = C * HW * 4

    Bt = 0 if force_two_phase else _choose_bt(B, slab_bytes, weight_bytes, budget)
    if Bt >= 1:
        out = _single_pass(x_flat, w1, b1_2d, w2, b2_2d, Bt, weight_bytes)
    else:
        thw = int(force_hw_tile) if force_hw_tile else _choose_hw_tile(
            C, HW, weight_bytes, budget)
        out = _two_phase(x_flat, w1, b1_2d, w2, b2_2d, thw, weight_bytes)

    return out.reshape(B, C, H, W)


def _reference(x_nchw, w1, b1, w2, b2):
    y = jnp.mean(x_nchw, axis=(2, 3))                         # (B, C)
    h = jnp.clip(y @ w1 + b1, 0.0, 6.0)
    s = jax.nn.sigmoid(h @ w2 + b2)
    return x_nchw * s[:, :, None, None]


if __name__ == "__main__":
    # Small shapes consistent with the module: inp = oup = C.
    B, C = 2, 4
    inp = oup = C
    reduction = 4
    hidden = _make_divisible(inp // reduction, 8)             # -> 8

    key = jax.random.PRNGKey(0)
    kx1, kx2, k1, k2, k3, k4 = jax.random.split(key, 6)

    # Deterministic parameter init (torch.nn.Linear-style uniform bounds).
    bound1 = 1.0 / math.sqrt(oup)
    w1 = jax.random.uniform(k1, (oup, hidden), jnp.float32, -bound1, bound1)
    b1 = jax.random.uniform(k2, (hidden,), jnp.float32, -bound1, bound1)
    bound2 = 1.0 / math.sqrt(hidden)
    w2 = jax.random.uniform(k3, (hidden, oup), jnp.float32, -bound2, bound2)
    b2 = jax.random.uniform(k4, (oup,), jnp.float32, -bound2, bound2)

    # 1) Single-pass path, HW multiple of 128 (lane-dense, unpadded).
    x1 = jax.random.normal(kx1, (B, C, 16, 16), dtype=jnp.float32)
    out1 = se_layer(x1, w1, b1, w2, b2)
    jax.block_until_ready(out1)
    ref1 = _reference(x1, w1, b1, w2, b2)
    assert out1.shape == x1.shape
    assert jnp.allclose(out1, ref1, atol=1e-5, rtol=1e-5), "single-pass mismatch"

    # 2) Single-pass path with a ragged spatial extent (13*13 = 169 lanes);
    #    the block's last dim equals the full HW, no host-side padding.
    x2 = jax.random.normal(kx2, (B, C, 13, 13), dtype=jnp.float32)
    out2 = se_layer(x2, w1, b1, w2, b2)
    jax.block_until_ready(out2)
    ref2 = _reference(x2, w1, b1, w2, b2)
    assert jnp.allclose(out2, ref2, atol=1e-5, rtol=1e-5), "ragged-HW mismatch"

    # 3) Force the two-phase accumulate-then-scale fallback (the path taken
    #    when a whole (Bt, C, HW) slab cannot fit VMEM), with a ragged tile.
    out3 = se_layer(x2, w1, b1, w2, b2, force_two_phase=True, force_hw_tile=128)
    jax.block_until_ready(out3)
    assert jnp.allclose(out3, ref2, atol=1e-5, rtol=1e-5), "two-phase mismatch"

    print("KERNEL_OK")
</pallas_src>

<mosaic_0001>
module attributes {stable_mosaic.version = 11 : i64} {
  func.func @_se_kernel(%arg0: i32, %arg1: memref<1x4x256xf32, #tpu.memory_space<vmem>>, %arg2: memref<4x8xf32, #tpu.memory_space<vmem>>, %arg3: memref<1x8xf32, #tpu.memory_space<vmem>>, %arg4: memref<8x4xf32, #tpu.memory_space<vmem>>, %arg5: memref<1x4xf32, #tpu.memory_space<vmem>>, %arg6: memref<1x4x256xf32, #tpu.memory_space<vmem>>) attributes {dimension_semantics = [#tpu.dimension_semantics<parallel>], iteration_bounds = array<i64: 2>, scalar_prefetch = 0 : i64, scratch_operands = 0 : i64, tpu.core_type = #tpu.core_type<tc>, window_params = [{transform_indices = @transform_0, window_bounds = array<i64: 1, 4, 256>}, {pipeline_mode = #tpu.pipeline_mode<synchronous>, transform_indices = @transform_1, window_bounds = array<i64: 4, 8>}, {pipeline_mode = #tpu.pipeline_mode<synchronous>, transform_indices = @transform_2, window_bounds = array<i64: 1, 8>}, {pipeline_mode = #tpu.pipeline_mode<synchronous>, transform_indices = @transform_3, window_bounds = array<i64: 8, 4>}, {pipeline_mode = #tpu.pipeline_mode<synchronous>, transform_indices = @transform_4, window_bounds = array<i64: 1, 4>}, {transform_indices = @transform_5, window_bounds = array<i64: 1, 4, 256>}]} {
    %c0 = arith.constant 0 : index
    %c0_0 = arith.constant 0 : index
    %c0_1 = arith.constant 0 : index
    %0 = vector.load %arg1[%c0, %c0_0, %c0_1] : memref<1x4x256xf32, #tpu.memory_space<vmem>>, vector<1x4x256xf32>
    %cst = arith.constant dense<0.000000e+00> : vector<1x4xf32>
    %1 = vector.multi_reduction <add>, %0, %cst [2] : vector<1x4x256xf32> to vector<1x4xf32>
    %cst_2 = arith.constant 3.906250e-03 : f32
    %2 = vector.broadcast %cst_2 : f32 to vector<1x4xf32>
    %3 = arith.mulf %1, %2 : vector<1x4xf32>
    %c0_3 = arith.constant 0 : index
    %c0_4 = arith.constant 0 : index
    %4 = vector.load %arg2[%c0_3, %c0_4] : memref<4x8xf32, #tpu.memory_space<vmem>>, vector<4x8xf32>
    %cst_5 = arith.constant dense<0.000000e+00> : vector<1x8xf32>
    %5 = tpu.matmul %3, %4, %cst_5 {dimension_numbers = #tpu.dot_dimension_numbers<[1], [0], [0], [1], [0, 0, 1, 1], [], []>} : vector<1x4xf32>, vector<4x8xf32>, vector<1x8xf32> -> vector<1x8xf32>
    %c0_6 = arith.constant 0 : index
    %c0_7 = arith.constant 0 : index
    %6 = vector.load %arg3[%c0_6, %c0_7] : memref<1x8xf32, #tpu.memory_space<vmem>>, vector<1x8xf32>
    %7 = arith.addf %5, %6 : vector<1x8xf32>
    %cst_8 = arith.constant 0.000000e+00 : f32
    %cst_9 = arith.constant 6.000000e+00 : f32
    %8 = vector.broadcast %cst_8 : f32 to vector<1x8xf32>
    %9 = arith.maximumf %8, %7 : vector<1x8xf32>
    %10 = vector.broadcast %cst_9 : f32 to vector<1x8xf32>
    %11 = arith.minimumf %10, %9 : vector<1x8xf32>
    %c0_10 = arith.constant 0 : index
    %c0_11 = arith.constant 0 : index
    %12 = vector.load %arg4[%c0_10, %c0_11] : memref<8x4xf32, #tpu.memory_space<vmem>>, vector<8x4xf32>
    %cst_12 = arith.constant dense<0.000000e+00> : vector<1x4xf32>
    %13 = tpu.matmul %11, %12, %cst_12 {dimension_numbers = #tpu.dot_dimension_numbers<[1], [0], [0], [1], [0, 0, 1, 1], [], []>} : vector<1x8xf32>, vector<8x4xf32>, vector<1x4xf32> -> vector<1x4xf32>
    %c0_13 = arith.constant 0 : index
    %c0_14 = arith.constant 0 : index
    %14 = vector.load %arg5[%c0_13, %c0_14] : memref<1x4xf32, #tpu.memory_space<vmem>>, vector<1x4xf32>
    %15 = arith.addf %13, %14 : vector<1x4xf32>
    %16 = arith.negf %15 : vector<1x4xf32>
    %17 = math.exp %16 : vector<1x4xf32>
    %cst_15 = arith.constant 1.000000e+00 : f32
    %18 = vector.broadcast %cst_15 : f32 to vector<1x4xf32>
    %19 = arith.addf %18, %17 : vector<1x4xf32>
    %20 = arith.divf %18, %19 : vector<1x4xf32>
    %21 = vector.shape_cast %20 : vector<1x4xf32> to vector<1x4x1xf32>
    %22 = vector.broadcast %21 : vector<1x4x1xf32> to vector<1x4x256xf32>
    %23 = arith.mulf %0, %22 : vector<1x4x256xf32>
    %c0_16 = arith.constant 0 : index
    %c0_17 = arith.constant 0 : index
    %c0_18 = arith.constant 0 : index
    %24 = vector.load %arg6[%c0_16, %c0_17, %c0_18] : memref<1x4x256xf32, #tpu.memory_space<vmem>>, vector<1x4x256xf32>
    tpu.vector_store %arg6[%c0_16, %c0_17, %c0_18], %23 {strides = array<i32>} : memref<1x4x256xf32, #tpu.memory_space<vmem>>, vector<1x4x256xf32>,
    return
  }
  func.func @transform_0(%arg0: i32) -> (i32, i32, i32) {
    %c0_i32 = arith.constant 0 : i32
    %c0_i32_0 = arith.constant 0 : i32
    %c0_i32_1 = arith.constant 0 : i32
    return %arg0, %c0_i32, %c0_i32_0 : i32, i32, i32
  }
  func.func @transform_1(%arg0: i32) -> (i32, i32) {
    %c0_i32 = arith.constant 0 : i32
    %c0_i32_0 = arith.constant 0 : i32
    %c0_i32_1 = arith.constant 0 : i32
    return %c0_i32, %c0_i32_0 : i32, i32
  }
  func.func @transform_2(%arg0: i32) -> (i32, i32) {
    %c0_i32 = arith.constant 0 : i32
    %c0_i32_0 = arith.constant 0 : i32
    %c0_i32_1 = arith.constant 0 : i32
    return %c0_i32, %c0_i32_0 : i32, i32
  }
  func.func @transform_3(%arg0: i32) -> (i32, i32) {
    %c0_i32 = arith.constant 0 : i32
    %c0_i32_0 = arith.constant 0 : i32
    %c0_i32_1 = arith.constant 0 : i32
    return %c0_i32, %c0_i32_0 : i32, i32
  }
  func.func @transform_4(%arg0: i32) -> (i32, i32) {
    %c0_i32 = arith.constant 0 : i32
    %c0_i32_0 = arith.constant 0 : i32
    %c0_i32_1 = arith.constant 0 : i32
    return %c0_i32, %c0_i32_0 : i32, i32
  }
  func.func @transform_5(%arg0: i32) -> (i32, i32, i32) {
    %c0_i32 = arith.constant 0 : i32
    %c0_i32_0 = arith.constant 0 : i32
    %c0_i32_1 = arith.constant 0 : i32
    return %arg0, %c0_i32, %c0_i32_0 : i32, i32, i32
  }
}

module attributes {stable_mosaic.version = 11 : i64} {
  func.func @_se_kernel(%arg0: i32, %arg1: memref<1x4x256xf32, #tpu.memory_space<vmem>>, %arg2: memref<4x8xf32, #tpu.memory_space<vmem>>, %arg3: memref<1x8xf32, #tpu.memory_space<vmem>>, %arg4: memref<8x4xf32, #tpu.memory_space<vmem>>, %arg5: memref<1x4xf32, #tpu.memory_space<vmem>>, %arg6: memref<1x4x256xf32, #tpu.memory_space<vmem>>) attributes {dimension_semantics = [#tpu.dimension_semantics<parallel>], iteration_bounds = array<i64: 2>, scalar_prefetch = 0 : i64, scratch_operands = 0 : i64, tpu.core_type = #tpu.core_type<tc>, window_params = [{transform_indices = @transform_0, window_bounds = array<i64: 1, 4, 256>}, {pipeline_mode = #tpu.pipeline_mode<synchronous>, transform_indices = @transform_1, window_bounds = array<i64: 4, 8>}, {pipeline_mode = #tpu.pipeline_mode<synchronous>, transform_indices = @transform_2, window_bounds = array<i64: 1, 8>}, {pipeline_mode = #tpu.pipeline_mode<synchronous>, transform_indices = @transform_3, window_bounds = array<i64: 8, 4>}, {pipeline_mode = #tpu.pipeline_mode<synchronous>, transform_indices = @transform_4, window_bounds = array<i64: 1, 4>}, {transform_indices = @transform_5, window_bounds = array<i64: 1, 4, 256>}]} {
    %c0 = arith.constant 0 : index
    %c0_0 = arith.constant 0 : index
    %c0_1 = arith.constant 0 : index
    %0 = vector.load %arg1[%c0, %c0_0, %c0_1] : memref<1x4x256xf32, #tpu.memory_space<vmem>>, vector<1x4x256xf32>
    %cst = arith.constant dense<0.000000e+00> : vector<1x4xf32>
    %1 = vector.multi_reduction <add>, %0, %cst [2] : vector<1x4x256xf32> to vector<1x4xf32>
    %cst_2 = arith.constant 3.906250e-03 : f32
    %2 = vector.broadcast %cst_2 : f32 to vector<1x4xf32>
    %3 = arith.mulf %1, %2 : vector<1x4xf32>
    %c0_3 = arith.constant 0 : index
    %c0_4 = arith.constant 0 : index
    %4 = vector.load %arg2[%c0_3, %c0_4] : memref<4x8xf32, #tpu.memory_space<vmem>>, vector<4x8xf32>
    %cst_5 = arith.constant dense<0.000000e+00> : vector<1x8xf32>
    %5 = tpu.matmul %3, %4, %cst_5 {dimension_numbers = #tpu.dot_dimension_numbers<[1], [0], [0], [1], [0, 0, 1, 1], [], []>} : vector<1x4xf32>, vector<4x8xf32>, vector<1x8xf32> -> vector<1x8xf32>
    %c0_6 = arith.constant 0 : index
    %c0_7 = arith.constant 0 : index
    %6 = vector.load %arg3[%c0_6, %c0_7] : memref<1x8xf32, #tpu.memory_space<vmem>>, vector<1x8xf32>
    %7 = arith.addf %5, %6 : vector<1x8xf32>
    %cst_8 = arith.constant 0.000000e+00 : f32
    %cst_9 = arith.constant 6.000000e+00 : f32
    %8 = vector.broadcast %cst_8 : f32 to vector<1x8xf32>
    %9 = arith.maximumf %8, %7 : vector<1x8xf32>
    %10 = vector.broadcast %cst_9 : f32 to vector<1x8xf32>
    %11 = arith.minimumf %10, %9 : vector<1x8xf32>
    %c0_10 = arith.constant 0 : index
    %c0_11 = arith.constant 0 : index
    %12 = vector.load %arg4[%c0_10, %c0_11] : memref<8x4xf32, #tpu.memory_space<vmem>>, vector<8x4xf32>
    %cst_12 = arith.constant dense<0.000000e+00> : vector<1x4xf32>
    %13 = tpu.matmul %11, %12, %cst_12 {dimension_numbers = #tpu.dot_dimension_numbers<[1], [0], [0], [1], [0, 0, 1, 1], [], []>} : vector<1x8xf32>, vector<8x4xf32>, vector<1x4xf32> -> vector<1x4xf32>
    %c0_13 = arith.constant 0 : index
    %c0_14 = arith.constant 0 : index
    %14 = vector.load %arg5[%c0_13, %c0_14] : memref<1x4xf32, #tpu.memory_space<vmem>>, vector<1x4xf32>
    %15 = arith.addf %13, %14 : vector<1x4xf32>
    %16 = arith.negf %15 : vector<1x4xf32>
    %17 = math.exp %16 : vector<1x4xf32>
    %cst_15 = arith.constant 1.000000e+00 : f32
    %18 = vector.broadcast %cst_15 : f32 to vector<1x4xf32>
    %19 = arith.addf %18, %17 : vector<1x4xf32>
    %20 = arith.divf %18, %19 : vector<1x4xf32>
    %21 = vector.shape_cast %20 : vector<1x4xf32> to vector<1x4x1xf32>
    %22 = vector.broadcast %21 : vector<1x4x1xf32> to vector<1x4x256xf32>
    %23 = arith.mulf %0, %22 : vector<1x4x256xf32>
    %c0_16 = arith.constant 0 : index
    %c0_17 = arith.constant 0 : index
    %c0_18 = arith.constant 0 : index
    %24 = vector.load %arg6[%c0_16, %c0_17, %c0_18] : memref<1x4x256xf32, #tpu.memory_space<vmem>>, vector<1x4x256xf32>
    tpu.vector_store %arg6[%c0_16, %c0_17, %c0_18], %23 {strides = array<i32>} : memref<1x4x256xf32, #tpu.memory_space<vmem>>, vector<1x4x256xf32>,
    return
  }
  func.func @transform_0(%arg0: i32) -> (i32, i32, i32) {
    %c0_i32 = arith.constant 0 : i32
    %c0_i32_0 = arith.constant 0 : i32
    %c0_i32_1 = arith.constant 0 : i32
    return %arg0, %c0_i32, %c0_i32_0 : i32, i32, i32
  }
  func.func @transform_1(%arg0: i32) -> (i32, i32) {
    %c0_i32 = arith.constant 0 : i32
    %c0_i32_0 = arith.constant 0 : i32
    %c0_i32_1 = arith.constant 0 : i32
    return %c0_i32, %c0_i32_0 : i32, i32
  }
  func.func @transform_2(%arg0: i32) -> (i32, i32) {
    %c0_i32 = arith.constant 0 : i32
    %c0_i32_0 = arith.constant 0 : i32
    %c0_i32_1 = arith.constant 0 : i32
    return %c0_i32, %c0_i32_0 : i32, i32
  }
  func.func @transform_3(%arg0: i32) -> (i32, i32) {
    %c0_i32 = arith.constant 0 : i32
    %c0_i32_0 = arith.constant 0 : i32
    %c0_i32_1 = arith.constant 0 : i32
    return %c0_i32, %c0_i32_0 : i32, i32
  }
  func.func @transform_4(%arg0: i32) -> (i32, i32) {
    %c0_i32 = arith.constant 0 : i32
    %c0_i32_0 = arith.constant 0 : i32
    %c0_i32_1 = arith.constant 0 : i32
    return %c0_i32, %c0_i32_0 : i32, i32
  }
  func.func @transform_5(%arg0: i32) -> (i32, i32, i32) {
    %c0_i32 = arith.constant 0 : i32
    %c0_i32_0 = arith.constant 0 : i32
    %c0_i32_1 = arith.constant 0 : i32
    return %arg0, %c0_i32, %c0_i32_0 : i32, i32, i32
  }
}

</mosaic_0001>

<llo_original>
// kernel: tpu_custom_call.1
$region0: #{tpu_custom_call.1}
  #allocation0 [shape = 'u32[]', space=smem, size = 0x4, offset = 0x4, fixed_abs, tag = 'smem constant byte address 0x4 - core index']
  #allocation1 [shape = 'u32[144,128]{1,0:T(1,128)}', space=vmem, size = 0x12000, scoped, tag = 'internal scratch']
  %s0 = inlined_call_operand.hbm [shape: f32[2,4,256], index: 0, kind: input, shape index: {}]
  %s1 = inlined_call_operand.vmem [shape: f32[4,8], index: 1, kind: input, shape index: {}]
  %s2 = inlined_call_operand.vmem [shape: f32[1,8], index: 2, kind: input, shape index: {}]
  %s3 = inlined_call_operand.vmem [shape: f32[8,4], index: 3, kind: input, shape index: {}]
  %s4 = inlined_call_operand.vmem [shape: f32[1,4], index: 4, kind: input, shape index: {}]
  %s5 = inlined_call_operand.hbm [shape: f32[2,4,256], index: 5, kind: output, shape index: {}]
  %s6 = sld [smem:[#allocation0]]
  $region57: #{tpu_custom_call.1} parent=0
    _
  %s8 = ssub.s32 1, %s6
  %s9 = scalar_select 0, %s8, %s6
  $region1: #{tpu_custom_call.1} parent=0
    #allocation2 [shape = 'u8[8192]{0}', space=vmem, size = 0x2000, scoped, tag = 'input window, operand 0']
    #allocation3 [shape = 's32[2]{0}', space=sflag, size = 0x8, scoped, tag = 'scoped memory for tpu_custom_call.1']
    #allocation4 [shape = 's32[2]{0}', space=sflag, size = 0x8, scoped, tag = 'scoped memory for tpu_custom_call.1']
    #allocation5 [shape = 'u8[8192]{0}', space=vmem, size = 0x2000, scoped, tag = 'output window, operand 0']
    %10 = vsyncpa [#allocation3], 0
    %s11 = scalar_lea.sflag [#allocation3], 1
    %12 = vsyncpa %s11, 0
    %13 = vsyncpa [#allocation4], 0
    %s14 = scalar_lea.sflag [#allocation4], 1
    %15 = vsyncpa %s14, 0
    loop: start=0, step=1, limit=4
    $region2: #{tpu_custom_call.1} parent=1 // loop_pre_header
      _
    $region3: #{tpu_custom_call.1} parent=1 // loop_header
      %s17 = sphi 0, %s21
      %p18 = scmp.ge.s32.totalorder %s17, 4
      %s27 = sphi 0, %s29
      %s30 = sphi 0, %s27
      %s31 = sphi 0, %s30
      %s47 = sphi 0, %s31
      %s51 = sphi 0, %s51
      %s53 = sphi 0, %s51
      %s54 = sphi 0, %s53
      %s68 = sphi 0, %s54
      %s72 = sphi 0, %s72
      %s74 = sphi 0, %s72
      %s75 = sphi 0, %s74
      %s89 = sphi 0, %s75
      %s93 = sphi 0, %s93
      %s95 = sphi 0, %s93
      %s96 = sphi 0, %s95
      %s110 = sphi 0, %s96
      %s114 = sphi 0, %s114
      %s116 = sphi 0, %s114
      %s117 = sphi 0, %s116
      %s131 = sphi 0, %s117
      %s137 = sphi 0, %s139
      %s140 = sphi 0, %s137
      %s141 = sphi 0, %s140
      %s157 = sphi 0, %s141
    $region4: #{tpu_custom_call.1} parent=1 // loop_header_branch
      %20 = sbr.rel (%p18) target = $region8
    $region5: #{tpu_custom_call.1} parent=1 // loop_body
      %s22 = ssub.s32 %s17, 1
      %s23 = ssub.s32 %s17, 2
      %s24 = sadd.s32 %s17, 1
      %s25 = ssub.s32 %s17, %s24
      %p26 = scmp.eq.s32.totalorder %s25, 0
      %s28 = sadd.s32 %s27, 1
      %s29 = scalar_select %p26, %s27, %s28
      %p32 = pneg %p26
      %p33 = scmp.eq.s32.totalorder %s17, 1
      %p34 = por %p32, %p33
      %p35 = scmp.ne.s32.totalorder %s27, %s30
      %p36 = scmp.eq.s32.totalorder %s17, 0
      %p37 = por %p35, %p36
      %p38 = scmp.ne.s32.totalorder %s27, %s30
      %p39 = scmp.eq.s32.totalorder %s22, 1
      %p40 = por %p38, %p39
      %p41 = scmp.ne.s32.totalorder %s30, %s31
      %p42 = scmp.eq.s32.totalorder %s22, 0
      %p43 = por %p41, %p42
      %p44 = scmp.ne.s32.totalorder %s30, %s31
      %p45 = scmp.eq.s32.totalorder %s23, 1
      %p46 = por %p44, %p45
      %p48 = scmp.ne.s32.totalorder %s31, %s47
      %p49 = scmp.eq.s32.totalorder %s23, 0
      %p50 = por %p48, %p49
      %s52 = sadd.s32 %s51, 1
      %p55 = scmp.eq.s32.totalorder %s17, 1
      %p56 = scmp.ne.s32.totalorder %s51, %s53
      %p57 = scmp.eq.s32.totalorder %s17, 0
      %p58 = por %p56, %p57
      %p59 = scmp.ne.s32.totalorder %s51, %s53
      %p60 = scmp.eq.s32.totalorder %s22, 1
      %p61 = por %p59, %p60
      %p62 = scmp.ne.s32.totalorder %s53, %s54
      %p63 = scmp.eq.s32.totalorder %s22, 0
      %p64 = por %p62, %p63
      %p65 = scmp.ne.s32.totalorder %s53, %s54
      %p66 = scmp.eq.s32.totalorder %s23, 1
      %p67 = por %p65, %p66
      %p69 = scmp.ne.s32.totalorder %s54, %s68
      %p70 = scmp.eq.s32.totalorder %s23, 0
      %p71 = por %p69, %p70
      %s73 = sadd.s32 %s72, 1
      %p76 = scmp.eq.s32.totalorder %s17, 1
      %p77 = scmp.ne.s32.totalorder %s72, %s74
      %p78 = scmp.eq.s32.totalorder %s17, 0
      %p79 = por %p77, %p78
      %p80 = scmp.ne.s32.totalorder %s72, %s74
      %p81 = scmp.eq.s32.totalorder %s22, 1
      %p82 = por %p80, %p81
      %p83 = scmp.ne.s32.totalorder %s74, %s75
      %p84 = scmp.eq.s32.totalorder %s22, 0
      %p85 = por %p83, %p84
      %p86 = scmp.ne.s32.totalorder %s74, %s75
      %p87 = scmp.eq.s32.totalorder %s23, 1
      %p88 = por %p86, %p87
      %p90 = scmp.ne.s32.totalorder %s75, %s89
      %p91 = scmp.eq.s32.totalorder %s23, 0
      %p92 = por %p90, %p91
      %s94 = sadd.s32 %s93, 1
      %p97 = scmp.eq.s32.totalorder %s17, 1
      %p98 = scmp.ne.s32.totalorder %s93, %s95
      %p99 = scmp.eq.s32.totalorder %s17, 0
      %p100 = por %p98, %p99
      %p101 = scmp.ne.s32.totalorder %s93, %s95
      %p102 = scmp.eq.s32.totalorder %s22, 1
      %p103 = por %p101, %p102
      %p104 = scmp.ne.s32.totalorder %s95, %s96
      %p105 = scmp.eq.s32.totalorder %s22, 0
      %p106 = por %p104, %p105
      %p107 = scmp.ne.s32.totalorder %s95, %s96
      %p108 = scmp.eq.s32.totalorder %s23, 1
      %p109 = por %p107, %p108
      %p111 = scmp.ne.s32.totalorder %s96, %s110
      %p112 = scmp.eq.s32.totalorder %s23, 0
      %p113 = por %p111, %p112
      %s115 = sadd.s32 %s114, 1
      %p118 = scmp.eq.s32.totalorder %s17, 1
      %p119 = scmp.ne.s32.totalorder %s114, %s116
      %p120 = scmp.eq.s32.totalorder %s17, 0
      %p121 = por %p119, %p120
      %p122 = scmp.ne.s32.totalorder %s114, %s116
      %p123 = scmp.eq.s32.totalorder %s22, 1
      %p124 = por %p122, %p123
      %p125 = scmp.ne.s32.totalorder %s116, %s117
      %p126 = scmp.eq.s32.totalorder %s22, 0
      %p127 = por %p125, %p126
      %p128 = scmp.ne.s32.totalorder %s116, %s117
      %p129 = scmp.eq.s32.totalorder %s23, 1
      %p130 = por %p128, %p129
      %p132 = scmp.ne.s32.totalorder %s117, %s131
      %p133 = scmp.eq.s32.totalorder %s23, 0
      %p134 = por %p132, %p133
      %s135 = ssub.s32 %s17, %s24
      %p136 = scmp.eq.s32.totalorder %s135, 0
      %s138 = sadd.s32 %s137, 1
      %s139 = scalar_select %p136, %s137, %s138
      %p142 = pneg %p136
      %p143 = scmp.eq.s32.totalorder %s17, 1
      %p144 = por %p142, %p143
      %p145 = scmp.ne.s32.totalorder %s137, %s140
      %p146 = scmp.eq.s32.totalorder %s17, 0
      %p147 = por %p145, %p146
      %p148 = scmp.ne.s32.totalorder %s137, %s140
      %p149 = scmp.eq.s32.totalorder %s22, 1
      %p150 = por %p148, %p149
      %p151 = scmp.ne.s32.totalorder %s140, %s141
      %p152 = scmp.eq.s32.totalorder %s22, 0
      %p153 = por %p151, %p152
      %p154 = scmp.ne.s32.totalorder %s140, %s141
      %p155 = scmp.eq.s32.totalorder %s23, 1
      %p156 = por %p154, %p155
      %p158 = scmp.ne.s32.totalorder %s141, %s157
      %p159 = scmp.eq.s32.totalorder %s23, 0
      %p160 = por %p158, %p159
      %p161 = scmp.le.s32.totalorder 1, %s17
      %p162 = scmp.lt.s32.totalorder %s17, 3
      %p163 = pnand %p161, %p162
      %p164 = pneg %p163
      // Predicated region
      $region9: #{tpu_custom_call.1} parent=5 // pred_check
        _
      $region10: #{tpu_custom_call.1} parent=5 // pred_check_branch
        %166 = sbr.rel (%p163) target = $region12
      $region11: #{tpu_custom_call.1} parent=5 // pred_region
        %s167 = ssub.s32 %s17, 1
        // Predicated region
        $region13: #{tpu_custom_call.1} parent=11 // pred_check
          %p168 = pneg %p64
        $region14: #{tpu_custom_call.1} parent=11 // pred_check_branch
          %170 = sbr.rel (%p168) target = $region16
        $region15: #{tpu_custom_call.1} parent=11 // pred_region
          _
        $region16: #{tpu_custom_call.1} parent=11 // pred_fallthru
          _
        // Predicated region
        $region17: #{tpu_custom_call.1} parent=11 // pred_check
          %p171 = pneg %p85
        $region18: #{tpu_custom_call.1} parent=11 // pred_check_branch
          %173 = sbr.rel (%p171) target = $region20
        $region19: #{tpu_custom_call.1} parent=11 // pred_region
          _
        $region20: #{tpu_custom_call.1} parent=11 // pred_fallthru
          _
        // Predicated region
        $region21: #{tpu_custom_call.1} parent=11 // pred_check
          %p174 = pneg %p106
        $region22: #{tpu_custom_call.1} parent=11 // pred_check_branch
          %176 = sbr.rel (%p174) target = $region24
        $region23: #{tpu_custom_call.1} parent=11 // pred_region
          _
        $region24: #{tpu_custom_call.1} parent=11 // pred_fallthru
          _
        // Predicated region
        $region25: #{tpu_custom_call.1} parent=11 // pred_check
          %p177 = pneg %p127
        $region26: #{tpu_custom_call.1} parent=11 // pred_check_branch
          %179 = sbr.rel (%p177) target = $region28
        $region27: #{tpu_custom_call.1} parent=11 // pred_region
          _
        $region28: #{tpu_custom_call.1} parent=11 // pred_fallthru
          _
      $region12: #{tpu_custom_call.1} parent=5 // pred_fallthru
        _
      %p180 = scmp.lt.s32.totalorder %s17, 2
      // Predicated region
      $region29: #{tpu_custom_call.1} parent=5 // pred_check
        %p181 = pneg %p180
      $region30: #{tpu_custom_call.1} parent=5 // pred_check_branch
        %183 = sbr.rel (%p181) target = $region32
      $region31: #{tpu_custom_call.1} parent=5 // pred_region
        // Predicated region
        $region33: #{tpu_custom_call.1} parent=31 // pred_check
          %p184 = pneg %p37
        $region34: #{tpu_custom_call.1} parent=31 // pred_check_branch
          %186 = sbr.rel (%p184) target = $region36
        $region35: #{tpu_custom_call.1} parent=31 // pred_region
          %s187 = sand.u32 %s27, 1
          %s188 = scalar_lea.sflag [#allocation3], %s187
          %s189 = sand.u32 %s27, 1
          %s190 = smul.addr %s189, 8
          %s191 = scalar_lea.vmem [#allocation2], %s190
          %s193 = ssub.s32 128, 128
          %194 = vsyncadd %s188, %s193
          %s195 = smul.addr %s17, 2
          %s196 = smul.addr %s195, 64
          %s197 = scalar_lea.hbm %s0, %s196
          %s199 = sshll.u32 %s191, 4
          %s200 = int_to_ptr.vmem [resolvable:$true] %s199
          %202 = dma.hbm_to_vmem [thread:$0]  %s197, 128, %s200, %s188
        $region36: #{tpu_custom_call.1} parent=31 // pred_fallthru
          _
      $region32: #{tpu_custom_call.1} parent=5 // pred_fallthru
        _
      %p203 = scmp.le.s32.totalorder 1, %s17
      %p204 = scmp.lt.s32.totalorder %s17, 3
      %p205 = pnand %p203, %p204
      %p206 = pneg %p205
      // Predicated region
      $region37: #{tpu_custom_call.1} parent=5 // pred_check
        _
      $region38: #{tpu_custom_call.1} parent=5 // pred_check_branch
        %208 = sbr.rel (%p205) target = $region40
      $region39: #{tpu_custom_call.1} parent=5 // pred_region
        %s209 = ssub.s32 %s17, 1
        %s210 = sand.u32 %s30, 1
        %s211 = scalar_lea.sflag [#allocation3], %s210
        %s212 = sand.u32 %s30, 1
        %s213 = smul.addr %s212, 8
        %s214 = scalar_lea.vmem [#allocation2], %s213
        // Predicated region
        $region41: #{tpu_custom_call.1} parent=39 // pred_check
          %p215 = pneg %p43
        $region42: #{tpu_custom_call.1} parent=39 // pred_check_branch
          %217 = sbr.rel (%p215) target = $region44
        $region43: #{tpu_custom_call.1} parent=39 // pred_region
          %218 = dma.done %s211, 128
        $region44: #{tpu_custom_call.1} parent=39 // pred_fallthru
          _
        %s219 = sand.u32 %s30, 1
        %s220 = scalar_lea.sflag [#allocation3], %s219
        %s221 = sand.u32 %s30, 1
        %s222 = smul.addr %s221, 8
        %s223 = scalar_lea.vmem [#allocation2], %s222
        %p224 = pneg %p43
        %p225 = pneg %p40
        %p226 = pneg %p64
        %p227 = pneg %p61
        %p228 = pneg %p85
        %p229 = pneg %p82
        %p230 = pneg %p106
        %p231 = pneg %p103
        %p232 = pneg %p127
        %p233 = pneg %p124
        %p234 = pneg %p153
        %p235 = pneg %p150
        %s236 = sand.u32 %s140, 1
        %s237 = scalar_lea.sflag [#allocation4], %s236
        %s238 = sand.u32 %s140, 1
        %s239 = smul.addr %s238, 8
        %s240 = scalar_lea.vmem [#allocation5], %s239
        %v241 = vld [vmem:[%s214] sm:$0xff]
        %v243 = vcombine.high %v241, %v241
        %vm245 = vcmask 1043456
        %v246 = vsel %vm245, %v241, 0.0
        %v247 = vsel %vm245, %v243, 0.0
        %v248 = vadd.f32 %v246, %v247
        %249 = vadd.xlane.f32.xlu0 %v248
        %v250 = vpop.xlane.xlu0 %249
        %v251 = vmul.f32 %v250, 0.00390625
        %v252 = vld [vmem:[%s1] sm:$0xf]
        %v253 = vld [vmem:[%s2] sm:$0x1]
        %v255 = vlaneseq
        %v256 = vand.u32 %v255, 127
        %v257 = vlaneseq
        %v258 = vshrl.u32 %v257, 7
        %v259 = vsub.s32 %v256, %v258
        %v260 = vrot.slane %v251, %v259
        %vm261 = vcmask 31744
        %v262 = vsel %vm261, %v260, 0
        %v265 = vsel %vm245, %v252, 0
        %267 = vmatprep.subr.mxu0 0.0
        %268 = vmatpush1.msra.mxu0 %v265
        %269 = vmatprep.subr.mxu0 0.0
        %270 = vmatpush1.msra.mxu0 0.0
        %271 = vmatprep.subr.mxu0 0.0
        %272 = vmatpush1.msra.mxu0 0.0
        %273 = vmatprep.subr.mxu0 0.0
        %274 = vmatpush1.msra.mxu0 0.0
        %275 = vmatprep.subr.mxu0 0.0
        %276 = vmatpush1.msra.mxu0 0.0
        %277 = vmatprep.subr.mxu0 0.0
        %278 = vmatpush1.msra.mxu0 0.0
        %279 = vmatprep.subr.mxu0 0.0
        %280 = vmatpush1.msra.mxu0 0.0
        %281 = vmatprep.subr.mxu0 0.0
        %282 = vmatpush1.msra.mxu0 0.0
        %283 = vmatprep.subr.mxu0 0.0
        %284 = vmatpush1.msra.mxu0 0.0
        %285 = vmatprep.subr.mxu0 0.0
        %286 = vmatpush1.msra.mxu0 0.0
        %287 = vmatprep.subr.mxu0 0.0
        %288 = vmatpush1.msra.mxu0 0.0
        %289 = vmatprep.subr.mxu0 0.0
        %290 = vmatpush1.msra.mxu0 0.0
        %291 = vmatprep.subr.mxu0 0.0
        %292 = vmatpush1.msra.mxu0 0.0
        %293 = vmatprep.subr.mxu0 0.0
        %294 = vmatpush1.msra.mxu0 0.0
        %295 = vmatprep.subr.mxu0 0.0
        %296 = vmatpush1.msra.mxu0 0.0
        %297 = vmatprep.subr.mxu0 0.0
        %298 = vmatpush1.msra.mxu0 0.0
        %299 = vmatprep.subr.mxu0 0.0
        %300 = vmatpush1.msra.mxu0 0.0
        %301 = vmatprep.subr.mxu0 0.0
        %302 = vmatpush1.msra.mxu0 0.0
        %303 = vmatprep.subr.mxu0 0.0
        %304 = vmatpush1.msra.mxu0 0.0
        %305 = vmatprep.subr.mxu0 0.0
        %306 = vmatpush1.msra.mxu0 0.0
        %307 = vmatprep.subr.mxu0 0.0
        %308 = vmatpush1.msra.mxu0 0.0
        %309 = vmatprep.subr.mxu0 0.0
        %310 = vmatpush1.msra.mxu0 0.0
        %311 = vmatprep.subr.mxu0 0.0
        %312 = vmatpush1.msra.mxu0 0.0
        %313 = vmatprep.subr.mxu0 0.0
        %314 = vmatpush1.msra.mxu0 0.0
        %315 = vmatprep.subr.mxu0 0.0
        %316 = vmatpush1.msra.mxu0 0.0
        %317 = vmatprep.subr.mxu0 0.0
        %318 = vmatpush1.msra.mxu0 0.0
        %319 = vmatprep.subr.mxu0 0.0
        %320 = vmatpush1.msra.mxu0 0.0
        %321 = vmatprep.subr.mxu0 0.0
        %322 = vmatpush1.msra.mxu0 0.0
        %323 = vmatprep.subr.mxu0 0.0
        %324 = vmatpush1.msra.mxu0 0.0
        %325 = vmatprep.subr.mxu0 0.0
        %326 = vmatpush1.msra.mxu0 0.0
        %327 = vmatprep.subr.mxu0 0.0
        %328 = vmatpush1.msra.mxu0 0.0
        %329 = vmatprep.subr.mxu0 0.0
        %330 = vmatpush1.msra.mxu0 0.0
        %331 = vmatprep.mubr.f32.mxu0 0.0
        %332 = vmatmul.mubr.f32.gmra.mrb[0].mxu0 %v262
        %v333 = vpop.f32.mrb[0].mxu0
        %v334 = vadd.f32 %v253, %v333
        %v335 = vpop.f32.mrb[0].mxu0
        %336 = vdwg.mxu0
        %v337 = vmax.f32 %v334, 0.0
        %v338 = vmin.f32 %v337, 6.0
        %v339 = vld [vmem:[%s3] sm:$0xff]
        %v340 = vld [vmem:[%s4] sm:$0x1]
        %vm341 = vcmask 64512
        %v343 = vsel %vm341, %v338, 0
        %345 = vmatprep.subr.mxu0 0.0
        %346 = vmatpush1.msra.mxu0 %v339
        %347 = vmatprep.subr.mxu0 0.0
        %348 = vmatpush1.msra.mxu0 0.0
        %349 = vmatprep.subr.mxu0 0.0
        %350 = vmatpush1.msra.mxu0 0.0
        %351 = vmatprep.subr.mxu0 0.0
        %352 = vmatpush1.msra.mxu0 0.0
        %353 = vmatprep.subr.mxu0 0.0
        %354 = vmatpush1.msra.mxu0 0.0
        %355 = vmatprep.subr.mxu0 0.0
        %356 = vmatpush1.msra.mxu0 0.0
        %357 = vmatprep.subr.mxu0 0.0
        %358 = vmatpush1.msra.mxu0 0.0
        %359 = vmatprep.subr.mxu0 0.0
        %360 = vmatpush1.msra.mxu0 0.0
        %361 = vmatprep.subr.mxu0 0.0
        %362 = vmatpush1.msra.mxu0 0.0
        %363 = vmatprep.subr.mxu0 0.0
        %364 = vmatpush1.msra.mxu0 0.0
        %365 = vmatprep.subr.mxu0 0.0
        %366 = vmatpush1.msra.mxu0 0.0
        %367 = vmatprep.subr.mxu0 0.0
        %368 = vmatpush1.msra.mxu0 0.0
        %369 = vmatprep.subr.mxu0 0.0
        %370 = vmatpush1.msra.mxu0 0.0
        %371 = vmatprep.subr.mxu0 0.0
        %372 = vmatpush1.msra.mxu0 0.0
        %373 = vmatprep.subr.mxu0 0.0
        %374 = vmatpush1.msra.mxu0 0.0
        %375 = vmatprep.subr.mxu0 0.0
        %376 = vmatpush1.msra.mxu0 0.0
        %377 = vmatprep.subr.mxu0 0.0
        %378 = vmatpush1.msra.mxu0 0.0
        %379 = vmatprep.subr.mxu0 0.0
        %380 = vmatpush1.msra.mxu0 0.0
        %381 = vmatprep.subr.mxu0 0.0
        %382 = vmatpush1.msra.mxu0 0.0
        %383 = vmatprep.subr.mxu0 0.0
        %384 = vmatpush1.msra.mxu0 0.0
        %385 = vmatprep.subr.mxu0 0.0
        %386 = vmatpush1.msra.mxu0 0.0
        %387 = vmatprep.subr.mxu0 0.0
        %388 = vmatpush1.msra.mxu0 0.0
        %389 = vmatprep.subr.mxu0 0.0
        %390 = vmatpush1.msra.mxu0 0.0
        %391 = vmatprep.subr.mxu0 0.0
        %392 = vmatpush1.msra.mxu0 0.0
        %393 = vmatprep.subr.mxu0 0.0
        %394 = vmatpush1.msra.mxu0 0.0
        %395 = vmatprep.subr.mxu0 0.0
        %396 = vmatpush1.msra.mxu0 0.0
        %397 = vmatprep.subr.mxu0 0.0
        %398 = vmatpush1.msra.mxu0 0.0
        %399 = vmatprep.subr.mxu0 0.0
        %400 = vmatpush1.msra.mxu0 0.0
        %401 = vmatprep.subr.mxu0 0.0
        %402 = vmatpush1.msra.mxu0 0.0
        %403 = vmatprep.subr.mxu0 0.0
        %404 = vmatpush1.msra.mxu0 0.0
        %405 = vmatprep.subr.mxu0 0.0
        %406 = vmatpush1.msra.mxu0 0.0
        %407 = vmatprep.subr.mxu0 0.0
        %408 = vmatpush1.msra.mxu0 0.0
        %409 = vmatprep.mubr.f32.mxu0 0.0
        %410 = vmatmul.mubr.f32.gmra.mrb[0].mxu0 %v343
        %v411 = vpop.f32.mrb[0].mxu0
        %v412 = vadd.f32 %v340, %v411
        %v413 = vpop.f32.mrb[0].mxu0
        %414 = vdwg.mxu0
        %v415 = vxor.u32 %v412, 2147483648
        %v416 = vmul.f32 %v415, 1.442695
        %v417 = vpow.pop %v416
        %v418 = vadd.f32 %v417, 1.0
        %v419 = vrcp.pop %v418
        %v420 = vmul.f32 1.0, %v419
        %v421 = vlaneseq
        %v422 = vshrl.u32 %v421, 7
        %v423 = vsub.s32 0, %v422
        %v424 = vrot.slane %v420, %v423
        %426 = vbcast.lane.b32.xlu0 %v424, 256
        %v427 = vpop.permute.xlu0 %426
        %v430 = vunpack.c.l.s4 839922192
        %v431 = vunpack.c.0.s8 %v430
        %v432 = vlaneseq
        %v433 = vshrl.u32 %v432, 7
        %v434 = vsub.s32 %v431, %v433
        %v435 = vrot.slane %v427, %v434
        %v437 = vmul.f32 %v241, %v435
        %438 = vst [vmem:[%s240] sm:$0xff] %v437
        %s439 = sand.u32 %s140, 1
        %s440 = scalar_lea.sflag [#allocation4], %s439
        %s441 = sand.u32 %s140, 1
        %s442 = smul.addr %s441, 8
        %s443 = scalar_lea.vmem [#allocation5], %s442
        // Predicated region
        $region45: #{tpu_custom_call.1} parent=39 // pred_check
          %p444 = pneg %p150
        $region46: #{tpu_custom_call.1} parent=39 // pred_check_branch
          %446 = sbr.rel (%p444) target = $region48
        $region47: #{tpu_custom_call.1} parent=39 // pred_region
          %s448 = ssub.s32 128, 128
          %449 = vsyncadd %s440, %s448
          %s450 = smul.addr %s22, 2
          %s451 = smul.addr %s450, 64
          %s452 = scalar_lea.hbm %s5, %s451
          %s454 = sshll.u32 %s443, 4
          %s455 = int_to_ptr.vmem [resolvable:$true] %s454
          %457 = dma.vmem_to_hbm [thread:$0]  %s455, 128, %s452, %s440
        $region48: #{tpu_custom_call.1} parent=39 // pred_fallthru
          _
      $region40: #{tpu_custom_call.1} parent=5 // pred_fallthru
        _
      %p458 = scmp.le.s32.totalorder 2, %s17
      // Predicated region
      $region49: #{tpu_custom_call.1} parent=5 // pred_check
        %p459 = pneg %p458
      $region50: #{tpu_custom_call.1} parent=5 // pred_check_branch
        %461 = sbr.rel (%p459) target = $region52
      $region51: #{tpu_custom_call.1} parent=5 // pred_region
        %s462 = ssub.s32 %s17, 2
        // Predicated region
        $region53: #{tpu_custom_call.1} parent=51 // pred_check
          %p463 = pneg %p156
        $region54: #{tpu_custom_call.1} parent=51 // pred_check_branch
          %465 = sbr.rel (%p463) target = $region56
        $region55: #{tpu_custom_call.1} parent=51 // pred_region
          %s466 = sand.u32 %s141, 1
          %s467 = scalar_lea.sflag [#allocation4], %s466
          %s468 = sand.u32 %s141, 1
          %s469 = smul.addr %s468, 8
          %s470 = scalar_lea.vmem [#allocation5], %s469
          %471 = dma.done %s467, 128
        $region56: #{tpu_custom_call.1} parent=51 // pred_fallthru
          _
      $region52: #{tpu_custom_call.1} parent=5 // pred_fallthru
        _
    $region6: #{tpu_custom_call.1} parent=1 // loop_footer
      %s21 = sadd.s32 1, %s17
    $region7: #{tpu_custom_call.1} parent=1 // loop_footer_branch
      %16 = sbr.rel target = $region3
    $region8: #{tpu_custom_call.1} parent=1 // loop_exit
      _
    %472 = vsyncpa [#allocation3], 1
    %s473 = scalar_lea.sflag [#allocation3], 1
    %474 = vsyncpa %s473, 1
    %475 = vsyncpa [#allocation4], 1
    %s476 = scalar_lea.sflag [#allocation4], 1
    %477 = vsyncpa %s476, 1

// kernel: tpu_custom_call.1
$region0: #{tpu_custom_call.1}
  #allocation0 [shape = 'u32[]', space=smem, size = 0x4, offset = 0x4, fixed_abs, tag = 'smem constant byte address 0x4 - core index']
  #allocation1 [shape = 'u32[144,128]{1,0:T(1,128)}', space=vmem, size = 0x12000, scoped, tag = 'internal scratch']
  %s0 = inlined_call_operand.hbm [shape: f32[2,4,256], index: 0, kind: input, shape index: {}]
  %s1 = inlined_call_operand.vmem [shape: f32[4,8], index: 1, kind: input, shape index: {}]
  %s2 = inlined_call_operand.vmem [shape: f32[1,8], index: 2, kind: input, shape index: {}]
  %s3 = inlined_call_operand.vmem [shape: f32[8,4], index: 3, kind: input, shape index: {}]
  %s4 = inlined_call_operand.vmem [shape: f32[1,4], index: 4, kind: input, shape index: {}]
  %s5 = inlined_call_operand.hbm [shape: f32[2,4,256], index: 5, kind: output, shape index: {}]
  %s6 = sld [smem:[#allocation0]]
  $region57: #{tpu_custom_call.1} parent=0
    _
  %s8 = ssub.s32 1, %s6
  %s9 = scalar_select 0, %s8, %s6
  $region1: #{tpu_custom_call.1} parent=0
    #allocation2 [shape = 'u8[8192]{0}', space=vmem, size = 0x2000, scoped, tag = 'input window, operand 0']
    #allocation3 [shape = 's32[2]{0}', space=sflag, size = 0x8, scoped, tag = 'scoped memory for tpu_custom_call.1']
    #allocation4 [shape = 's32[2]{0}', space=sflag, size = 0x8, scoped, tag = 'scoped memory for tpu_custom_call.1']
    #allocation5 [shape = 'u8[8192]{0}', space=vmem, size = 0x2000, scoped, tag = 'output window, operand 0']
    %10 = vsyncpa [#allocation3], 0
    %s11 = scalar_lea.sflag [#allocation3], 1
    %12 = vsyncpa %s11, 0
    %13 = vsyncpa [#allocation4], 0
    %s14 = scalar_lea.sflag [#allocation4], 1
    %15 = vsyncpa %s14, 0
    loop: start=0, step=1, limit=4
    $region2: #{tpu_custom_call.1} parent=1 // loop_pre_header
      _
    $region3: #{tpu_custom_call.1} parent=1 // loop_header
      %s17 = sphi 0, %s21
      %p18 = scmp.ge.s32.totalorder %s17, 4
      %s27 = sphi 0, %s29
      %s30 = sphi 0, %s27
      %s31 = sphi 0, %s30
      %s47 = sphi 0, %s31
      %s51 = sphi 0, %s51
      %s53 = sphi 0, %s51
      %s54 = sphi 0, %s53
      %s68 = sphi 0, %s54
      %s72 = sphi 0, %s72
      %s74 = sphi 0, %s72
      %s75 = sphi 0, %s74
      %s89 = sphi 0, %s75
      %s93 = sphi 0, %s93
      %s95 = sphi 0, %s93
      %s96 = sphi 0, %s95
      %s110 = sphi 0, %s96
      %s114 = sphi 0, %s114
      %s116 = sphi 0, %s114
      %s117 = sphi 0, %s116
      %s131 = sphi 0, %s117
      %s137 = sphi 0, %s139
      %s140 = sphi 0, %s137
      %s141 = sphi 0, %s140
      %s157 = sphi 0, %s141
    $region4: #{tpu_custom_call.1} parent=1 // loop_header_branch
      %20 = sbr.rel (%p18) target = $region8
    $region5: #{tpu_custom_call.1} parent=1 // loop_body
      %s22 = ssub.s32 %s17, 1
      %s23 = ssub.s32 %s17, 2
      %s24 = sadd.s32 %s17, 1
      %s25 = ssub.s32 %s17, %s24
      %p26 = scmp.eq.s32.totalorder %s25, 0
      %s28 = sadd.s32 %s27, 1
      %s29 = scalar_select %p26, %s27, %s28
      %p32 = pneg %p26
      %p33 = scmp.eq.s32.totalorder %s17, 1
      %p34 = por %p32, %p33
      %p35 = scmp.ne.s32.totalorder %s27, %s30
      %p36 = scmp.eq.s32.totalorder %s17, 0
      %p37 = por %p35, %p36
      %p38 = scmp.ne.s32.totalorder %s27, %s30
      %p39 = scmp.eq.s32.totalorder %s22, 1
      %p40 = por %p38, %p39
      %p41 = scmp.ne.s32.totalorder %s30, %s31
      %p42 = scmp.eq.s32.totalorder %s22, 0
      %p43 = por %p41, %p42
      %p44 = scmp.ne.s32.totalorder %s30, %s31
      %p45 = scmp.eq.s32.totalorder %s23, 1
      %p46 = por %p44, %p45
      %p48 = scmp.ne.s32.totalorder %s31, %s47
      %p49 = scmp.eq.s32.totalorder %s23, 0
      %p50 = por %p48, %p49
      %s52 = sadd.s32 %s51, 1
      %p55 = scmp.eq.s32.totalorder %s17, 1
      %p56 = scmp.ne.s32.totalorder %s51, %s53
      %p57 = scmp.eq.s32.totalorder %s17, 0
      %p58 = por %p56, %p57
      %p59 = scmp.ne.s32.totalorder %s51, %s53
      %p60 = scmp.eq.s32.totalorder %s22, 1
      %p61 = por %p59, %p60
      %p62 = scmp.ne.s32.totalorder %s53, %s54
      %p63 = scmp.eq.s32.totalorder %s22, 0
      %p64 = por %p62, %p63
      %p65 = scmp.ne.s32.totalorder %s53, %s54
      %p66 = scmp.eq.s32.totalorder %s23, 1
      %p67 = por %p65, %p66
      %p69 = scmp.ne.s32.totalorder %s54, %s68
      %p70 = scmp.eq.s32.totalorder %s23, 0
      %p71 = por %p69, %p70
      %s73 = sadd.s32 %s72, 1
      %p76 = scmp.eq.s32.totalorder %s17, 1
      %p77 = scmp.ne.s32.totalorder %s72, %s74
      %p78 = scmp.eq.s32.totalorder %s17, 0
      %p79 = por %p77, %p78
      %p80 = scmp.ne.s32.totalorder %s72, %s74
      %p81 = scmp.eq.s32.totalorder %s22, 1
      %p82 = por %p80, %p81
      %p83 = scmp.ne.s32.totalorder %s74, %s75
      %p84 = scmp.eq.s32.totalorder %s22, 0
      %p85 = por %p83, %p84
      %p86 = scmp.ne.s32.totalorder %s74, %s75
      %p87 = scmp.eq.s32.totalorder %s23, 1
      %p88 = por %p86, %p87
      %p90 = scmp.ne.s32.totalorder %s75, %s89
      %p91 = scmp.eq.s32.totalorder %s23, 0
      %p92 = por %p90, %p91
      %s94 = sadd.s32 %s93, 1
      %p97 = scmp.eq.s32.totalorder %s17, 1
      %p98 = scmp.ne.s32.totalorder %s93, %s95
      %p99 = scmp.eq.s32.totalorder %s17, 0
      %p100 = por %p98, %p99
      %p101 = scmp.ne.s32.totalorder %s93, %s95
      %p102 = scmp.eq.s32.totalorder %s22, 1
      %p103 = por %p101, %p102
      %p104 = scmp.ne.s32.totalorder %s95, %s96
      %p105 = scmp.eq.s32.totalorder %s22, 0
      %p106 = por %p104, %p105
      %p107 = scmp.ne.s32.totalorder %s95, %s96
      %p108 = scmp.eq.s32.totalorder %s23, 1
      %p109 = por %p107, %p108
      %p111 = scmp.ne.s32.totalorder %s96, %s110
      %p112 = scmp.eq.s32.totalorder %s23, 0
      %p113 = por %p111, %p112
      %s115 = sadd.s32 %s114, 1
      %p118 = scmp.eq.s32.totalorder %s17, 1
      %p119 = scmp.ne.s32.totalorder %s114, %s116
      %p120 = scmp.eq.s32.totalorder %s17, 0
      %p121 = por %p119, %p120
      %p122 = scmp.ne.s32.totalorder %s114, %s116
      %p123 = scmp.eq.s32.totalorder %s22, 1
      %p124 = por %p122, %p123
      %p125 = scmp.ne.s32.totalorder %s116, %s117
      %p126 = scmp.eq.s32.totalorder %s22, 0
      %p127 = por %p125, %p126
      %p128 = scmp.ne.s32.totalorder %s116, %s117
      %p129 = scmp.eq.s32.totalorder %s23, 1
      %p130 = por %p128, %p129
      %p132 = scmp.ne.s32.totalorder %s117, %s131
      %p133 = scmp.eq.s32.totalorder %s23, 0
      %p134 = por %p132, %p133
      %s135 = ssub.s32 %s17, %s24
      %p136 = scmp.eq.s32.totalorder %s135, 0
      %s138 = sadd.s32 %s137, 1
      %s139 = scalar_select %p136, %s137, %s138
      %p142 = pneg %p136
      %p143 = scmp.eq.s32.totalorder %s17, 1
      %p144 = por %p142, %p143
      %p145 = scmp.ne.s32.totalorder %s137, %s140
      %p146 = scmp.eq.s32.totalorder %s17, 0
      %p147 = por %p145, %p146
      %p148 = scmp.ne.s32.totalorder %s137, %s140
      %p149 = scmp.eq.s32.totalorder %s22, 1
      %p150 = por %p148, %p149
      %p151 = scmp.ne.s32.totalorder %s140, %s141
      %p152 = scmp.eq.s32.totalorder %s22, 0
      %p153 = por %p151, %p152
      %p154 = scmp.ne.s32.totalorder %s140, %s141
      %p155 = scmp.eq.s32.totalorder %s23, 1
      %p156 = por %p154, %p155
      %p158 = scmp.ne.s32.totalorder %s141, %s157
      %p159 = scmp.eq.s32.totalorder %s23, 0
      %p160 = por %p158, %p159
      %p161 = scmp.le.s32.totalorder 1, %s17
      %p162 = scmp.lt.s32.totalorder %s17, 3
      %p163 = pnand %p161, %p162
      %p164 = pneg %p163
      // Predicated region
      $region9: #{tpu_custom_call.1} parent=5 // pred_check
        _
      $region10: #{tpu_custom_call.1} parent=5 // pred_check_branch
        %166 = sbr.rel (%p163) target = $region12
      $region11: #{tpu_custom_call.1} parent=5 // pred_region
        %s167 = ssub.s32 %s17, 1
        // Predicated region
        $region13: #{tpu_custom_call.1} parent=11 // pred_check
          %p168 = pneg %p64
        $region14: #{tpu_custom_call.1} parent=11 // pred_check_branch
          %170 = sbr.rel (%p168) target = $region16
        $region15: #{tpu_custom_call.1} parent=11 // pred_region
          _
        $region16: #{tpu_custom_call.1} parent=11 // pred_fallthru
          _
        // Predicated region
        $region17: #{tpu_custom_call.1} parent=11 // pred_check
          %p171 = pneg %p85
        $region18: #{tpu_custom_call.1} parent=11 // pred_check_branch
          %173 = sbr.rel (%p171) target = $region20
        $region19: #{tpu_custom_call.1} parent=11 // pred_region
          _
        $region20: #{tpu_custom_call.1} parent=11 // pred_fallthru
          _
        // Predicated region
        $region21: #{tpu_custom_call.1} parent=11 // pred_check
          %p174 = pneg %p106
        $region22: #{tpu_custom_call.1} parent=11 // pred_check_branch
          %176 = sbr.rel (%p174) target = $region24
        $region23: #{tpu_custom_call.1} parent=11 // pred_region
          _
        $region24: #{tpu_custom_call.1} parent=11 // pred_fallthru
          _
        // Predicated region
        $region25: #{tpu_custom_call.1} parent=11 // pred_check
          %p177 = pneg %p127
        $region26: #{tpu_custom_call.1} parent=11 // pred_check_branch
          %179 = sbr.rel (%p177) target = $region28
        $region27: #{tpu_custom_call.1} parent=11 // pred_region
          _
        $region28: #{tpu_custom_call.1} parent=11 // pred_fallthru
          _
      $region12: #{tpu_custom_call.1} parent=5 // pred_fallthru
        _
      %p180 = scmp.lt.s32.totalorder %s17, 2
      // Predicated region
      $region29: #{tpu_custom_call.1} parent=5 // pred_check
        %p181 = pneg %p180
      $region30: #{tpu_custom_call.1} parent=5 // pred_check_branch
        %183 = sbr.rel (%p181) target = $region32
      $region31: #{tpu_custom_call.1} parent=5 // pred_region
        // Predicated region
        $region33: #{tpu_custom_call.1} parent=31 // pred_check
          %p184 = pneg %p37
        $region34: #{tpu_custom_call.1} parent=31 // pred_check_branch
          %186 = sbr.rel (%p184) target = $region36
        $region35: #{tpu_custom_call.1} parent=31 // pred_region
          %s187 = sand.u32 %s27, 1
          %s188 = scalar_lea.sflag [#allocation3], %s187
          %s189 = sand.u32 %s27, 1
          %s190 = smul.addr %s189, 8
          %s191 = scalar_lea.vmem [#allocation2], %s190
          %s193 = ssub.s32 128, 128
          %194 = vsyncadd %s188, %s193
          %s195 = smul.addr %s17, 2
          %s196 = smul.addr %s195, 64
          %s197 = scalar_lea.hbm %s0, %s196
          %s199 = sshll.u32 %s191, 4
          %s200 = int_to_ptr.vmem [resolvable:$true] %s199
          %202 = dma.hbm_to_vmem [thread:$0]  %s197, 128, %s200, %s188
        $region36: #{tpu_custom_call.1} parent=31 // pred_fallthru
          _
      $region32: #{tpu_custom_call.1} parent=5 // pred_fallthru
        _
      %p203 = scmp.le.s32.totalorder 1, %s17
      %p204 = scmp.lt.s32.totalorder %s17, 3
      %p205 = pnand %p203, %p204
      %p206 = pneg %p205
      // Predicated region
      $region37: #{tpu_custom_call.1} parent=5 // pred_check
        _
      $region38: #{tpu_custom_call.1} parent=5 // pred_check_branch
        %208 = sbr.rel (%p205) target = $region40
      $region39: #{tpu_custom_call.1} parent=5 // pred_region
        %s209 = ssub.s32 %s17, 1
        %s210 = sand.u32 %s30, 1
        %s211 = scalar_lea.sflag [#allocation3], %s210
        %s212 = sand.u32 %s30, 1
        %s213 = smul.addr %s212, 8
        %s214 = scalar_lea.vmem [#allocation2], %s213
        // Predicated region
        $region41: #{tpu_custom_call.1} parent=39 // pred_check
          %p215 = pneg %p43
        $region42: #{tpu_custom_call.1} parent=39 // pred_check_branch
          %217 = sbr.rel (%p215) target = $region44
        $region43: #{tpu_custom_call.1} parent=39 // pred_region
          %218 = dma.done %s211, 128
        $region44: #{tpu_custom_call.1} parent=39 // pred_fallthru
          _
        %s219 = sand.u32 %s30, 1
        %s220 = scalar_lea.sflag [#allocation3], %s219
        %s221 = sand.u32 %s30, 1
        %s222 = smul.addr %s221, 8
        %s223 = scalar_lea.vmem [#allocation2], %s222
        %p224 = pneg %p43
        %p225 = pneg %p40
        %p226 = pneg %p64
        %p227 = pneg %p61
        %p228 = pneg %p85
        %p229 = pneg %p82
        %p230 = pneg %p106
        %p231 = pneg %p103
        %p232 = pneg %p127
        %p233 = pneg %p124
        %p234 = pneg %p153
        %p235 = pneg %p150
        %s236 = sand.u32 %s140, 1
        %s237 = scalar_lea.sflag [#allocation4], %s236
        %s238 = sand.u32 %s140, 1
        %s239 = smul.addr %s238, 8
        %s240 = scalar_lea.vmem [#allocation5], %s239
        %v241 = vld [vmem:[%s214] sm:$0xff]
        %v243 = vcombine.high %v241, %v241
        %vm245 = vcmask 1043456
        %v246 = vsel %vm245, %v241, 0.0
        %v247 = vsel %vm245, %v243, 0.0
        %v248 = vadd.f32 %v246, %v247
        %249 = vadd.xlane.f32.xlu0 %v248
        %v250 = vpop.xlane.xlu0 %249
        %v251 = vmul.f32 %v250, 0.00390625
        %v252 = vld [vmem:[%s1] sm:$0xf]
        %v253 = vld [vmem:[%s2] sm:$0x1]
        %v255 = vlaneseq
        %v256 = vand.u32 %v255, 127
        %v257 = vlaneseq
        %v258 = vshrl.u32 %v257, 7
        %v259 = vsub.s32 %v256, %v258
        %v260 = vrot.slane %v251, %v259
        %vm261 = vcmask 31744
        %v262 = vsel %vm261, %v260, 0
        %v265 = vsel %vm245, %v252, 0
        %267 = vmatprep.subr.mxu0 0.0
        %268 = vmatpush1.msra.mxu0 %v265
        %269 = vmatprep.subr.mxu0 0.0
        %270 = vmatpush1.msra.mxu0 0.0
        %271 = vmatprep.subr.mxu0 0.0
        %272 = vmatpush1.msra.mxu0 0.0
        %273 = vmatprep.subr.mxu0 0.0
        %274 = vmatpush1.msra.mxu0 0.0
        %275 = vmatprep.subr.mxu0 0.0
        %276 = vmatpush1.msra.mxu0 0.0
        %277 = vmatprep.subr.mxu0 0.0
        %278 = vmatpush1.msra.mxu0 0.0
        %279 = vmatprep.subr.mxu0 0.0
        %280 = vmatpush1.msra.mxu0 0.0
        %281 = vmatprep.subr.mxu0 0.0
        %282 = vmatpush1.msra.mxu0 0.0
        %283 = vmatprep.subr.mxu0 0.0
        %284 = vmatpush1.msra.mxu0 0.0
        %285 = vmatprep.subr.mxu0 0.0
        %286 = vmatpush1.msra.mxu0 0.0
        %287 = vmatprep.subr.mxu0 0.0
        %288 = vmatpush1.msra.mxu0 0.0
        %289 = vmatprep.subr.mxu0 0.0
        %290 = vmatpush1.msra.mxu0 0.0
        %291 = vmatprep.subr.mxu0 0.0
        %292 = vmatpush1.msra.mxu0 0.0
        %293 = vmatprep.subr.mxu0 0.0
        %294 = vmatpush1.msra.mxu0 0.0
        %295 = vmatprep.subr.mxu0 0.0
        %296 = vmatpush1.msra.mxu0 0.0
        %297 = vmatprep.subr.mxu0 0.0
        %298 = vmatpush1.msra.mxu0 0.0
        %299 = vmatprep.subr.mxu0 0.0
        %300 = vmatpush1.msra.mxu0 0.0
        %301 = vmatprep.subr.mxu0 0.0
        %302 = vmatpush1.msra.mxu0 0.0
        %303 = vmatprep.subr.mxu0 0.0
        %304 = vmatpush1.msra.mxu0 0.0
        %305 = vmatprep.subr.mxu0 0.0
        %306 = vmatpush1.msra.mxu0 0.0
        %307 = vmatprep.subr.mxu0 0.0
        %308 = vmatpush1.msra.mxu0 0.0
        %309 = vmatprep.subr.mxu0 0.0
        %310 = vmatpush1.msra.mxu0 0.0
        %311 = vmatprep.subr.mxu0 0.0
        %312 = vmatpush1.msra.mxu0 0.0
        %313 = vmatprep.subr.mxu0 0.0
        %314 = vmatpush1.msra.mxu0 0.0
        %315 = vmatprep.subr.mxu0 0.0
        %316 = vmatpush1.msra.mxu0 0.0
        %317 = vmatprep.subr.mxu0 0.0
        %318 = vmatpush1.msra.mxu0 0.0
        %319 = vmatprep.subr.mxu0 0.0
        %320 = vmatpush1.msra.mxu0 0.0
        %321 = vmatprep.subr.mxu0 0.0
        %322 = vmatpush1.msra.mxu0 0.0
        %323 = vmatprep.subr.mxu0 0.0
        %324 = vmatpush1.msra.mxu0 0.0
        %325 = vmatprep.subr.mxu0 0.0
        %326 = vmatpush1.msra.mxu0 0.0
        %327 = vmatprep.subr.mxu0 0.0
        %328 = vmatpush1.msra.mxu0 0.0
        %329 = vmatprep.subr.mxu0 0.0
        %330 = vmatpush1.msra.mxu0 0.0
        %331 = vmatprep.mubr.f32.mxu0 0.0
        %332 = vmatmul.mubr.f32.gmra.mrb[0].mxu0 %v262
        %v333 = vpop.f32.mrb[0].mxu0
        %v334 = vadd.f32 %v253, %v333
        %v335 = vpop.f32.mrb[0].mxu0
        %336 = vdwg.mxu0
        %v337 = vmax.f32 %v334, 0.0
        %v338 = vmin.f32 %v337, 6.0
        %v339 = vld [vmem:[%s3] sm:$0xff]
        %v340 = vld [vmem:[%s4] sm:$0x1]
        %vm341 = vcmask 64512
        %v343 = vsel %vm341, %v338, 0
        %345 = vmatprep.subr.mxu0 0.0
        %346 = vmatpush1.msra.mxu0 %v339
        %347 = vmatprep.subr.mxu0 0.0
        %348 = vmatpush1.msra.mxu0 0.0
        %349 = vmatprep.subr.mxu0 0.0
        %350 = vmatpush1.msra.mxu0 0.0
        %351 = vmatprep.subr.mxu0 0.0
        %352 = vmatpush1.msra.mxu0 0.0
        %353 = vmatprep.subr.mxu0 0.0
        %354 = vmatpush1.msra.mxu0 0.0
        %355 = vmatprep.subr.mxu0 0.0
        %356 = vmatpush1.msra.mxu0 0.0
        %357 = vmatprep.subr.mxu0 0.0
        %358 = vmatpush1.msra.mxu0 0.0
        %359 = vmatprep.subr.mxu0 0.0
        %360 = vmatpush1.msra.mxu0 0.0
        %361 = vmatprep.subr.mxu0 0.0
        %362 = vmatpush1.msra.mxu0 0.0
        %363 = vmatprep.subr.mxu0 0.0
        %364 = vmatpush1.msra.mxu0 0.0
        %365 = vmatprep.subr.mxu0 0.0
        %366 = vmatpush1.msra.mxu0 0.0
        %367 = vmatprep.subr.mxu0 0.0
        %368 = vmatpush1.msra.mxu0 0.0
        %369 = vmatprep.subr.mxu0 0.0
        %370 = vmatpush1.msra.mxu0 0.0
        %371 = vmatprep.subr.mxu0 0.0
        %372 = vmatpush1.msra.mxu0 0.0
        %373 = vmatprep.subr.mxu0 0.0
        %374 = vmatpush1.msra.mxu0 0.0
        %375 = vmatprep.subr.mxu0 0.0
        %376 = vmatpush1.msra.mxu0 0.0
        %377 = vmatprep.subr.mxu0 0.0
        %378 = vmatpush1.msra.mxu0 0.0
        %379 = vmatprep.subr.mxu0 0.0
        %380 = vmatpush1.msra.mxu0 0.0
        %381 = vmatprep.subr.mxu0 0.0
        %382 = vmatpush1.msra.mxu0 0.0
        %383 = vmatprep.subr.mxu0 0.0
        %384 = vmatpush1.msra.mxu0 0.0
        %385 = vmatprep.subr.mxu0 0.0
        %386 = vmatpush1.msra.mxu0 0.0
        %387 = vmatprep.subr.mxu0 0.0
        %388 = vmatpush1.msra.mxu0 0.0
        %389 = vmatprep.subr.mxu0 0.0
        %390 = vmatpush1.msra.mxu0 0.0
        %391 = vmatprep.subr.mxu0 0.0
        %392 = vmatpush1.msra.mxu0 0.0
        %393 = vmatprep.subr.mxu0 0.0
        %394 = vmatpush1.msra.mxu0 0.0
        %395 = vmatprep.subr.mxu0 0.0
        %396 = vmatpush1.msra.mxu0 0.0
        %397 = vmatprep.subr.mxu0 0.0
        %398 = vmatpush1.msra.mxu0 0.0
        %399 = vmatprep.subr.mxu0 0.0
        %400 = vmatpush1.msra.mxu0 0.0
        %401 = vmatprep.subr.mxu0 0.0
        %402 = vmatpush1.msra.mxu0 0.0
        %403 = vmatprep.subr.mxu0 0.0
        %404 = vmatpush1.msra.mxu0 0.0
        %405 = vmatprep.subr.mxu0 0.0
        %406 = vmatpush1.msra.mxu0 0.0
        %407 = vmatprep.subr.mxu0 0.0
        %408 = vmatpush1.msra.mxu0 0.0
        %409 = vmatprep.mubr.f32.mxu0 0.0
        %410 = vmatmul.mubr.f32.gmra.mrb[0].mxu0 %v343
        %v411 = vpop.f32.mrb[0].mxu0
        %v412 = vadd.f32 %v340, %v411
        %v413 = vpop.f32.mrb[0].mxu0
        %414 = vdwg.mxu0
        %v415 = vxor.u32 %v412, 2147483648
        %v416 = vmul.f32 %v415, 1.442695
        %v417 = vpow.pop %v416
        %v418 = vadd.f32 %v417, 1.0
        %v419 = vrcp.pop %v418
        %v420 = vmul.f32 1.0, %v419
        %v421 = vlaneseq
        %v422 = vshrl.u32 %v421, 7
        %v423 = vsub.s32 0, %v422
        %v424 = vrot.slane %v420, %v423
        %426 = vbcast.lane.b32.xlu0 %v424, 256
        %v427 = vpop.permute.xlu0 %426
        %v430 = vunpack.c.l.s4 839922192
        %v431 = vunpack.c.0.s8 %v430
        %v432 = vlaneseq
        %v433 = vshrl.u32 %v432, 7
        %v434 = vsub.s32 %v431, %v433
        %v435 = vrot.slane %v427, %v434
        %v437 = vmul.f32 %v241, %v435
        %438 = vst [vmem:[%s240] sm:$0xff] %v437
        %s439 = sand.u32 %s140, 1
        %s440 = scalar_lea.sflag [#allocation4], %s439
        %s441 = sand.u32 %s140, 1
        %s442 = smul.addr %s441, 8
        %s443 = scalar_lea.vmem [#allocation5], %s442
        // Predicated region
        $region45: #{tpu_custom_call.1} parent=39 // pred_check
          %p444 = pneg %p150
        $region46: #{tpu_custom_call.1} parent=39 // pred_check_branch
          %446 = sbr.rel (%p444) target = $region48
        $region47: #{tpu_custom_call.1} parent=39 // pred_region
          %s448 = ssub.s32 128, 128
          %449 = vsyncadd %s440, %s448
          %s450 = smul.addr %s22, 2
          %s451 = smul.addr %s450, 64
          %s452 = scalar_lea.hbm %s5, %s451
          %s454 = sshll.u32 %s443, 4
          %s455 = int_to_ptr.vmem [resolvable:$true] %s454
          %457 = dma.vmem_to_hbm [thread:$0]  %s455, 128, %s452, %s440
        $region48: #{tpu_custom_call.1} parent=39 // pred_fallthru
          _
      $region40: #{tpu_custom_call.1} parent=5 // pred_fallthru
        _
      %p458 = scmp.le.s32.totalorder 2, %s17
      // Predicated region
      $region49: #{tpu_custom_call.1} parent=5 // pred_check
        %p459 = pneg %p458
      $region50: #{tpu_custom_call.1} parent=5 // pred_check_branch
        %461 = sbr.rel (%p459) target = $region52
      $region51: #{tpu_custom_call.1} parent=5 // pred_region
        %s462 = ssub.s32 %s17, 2
        // Predicated region
        $region53: #{tpu_custom_call.1} parent=51 // pred_check
          %p463 = pneg %p156
        $region54: #{tpu_custom_call.1} parent=51 // pred_check_branch
          %465 = sbr.rel (%p463) target = $region56
        $region55: #{tpu_custom_call.1} parent=51 // pred_region
          %s466 = sand.u32 %s141, 1
          %s467 = scalar_lea.sflag [#allocation4], %s466
          %s468 = sand.u32 %s141, 1
          %s469 = smul.addr %s468, 8
          %s470 = scalar_lea.vmem [#allocation5], %s469
          %471 = dma.done %s467, 128
        $region56: #{tpu_custom_call.1} parent=51 // pred_fallthru
          _
      $region52: #{tpu_custom_call.1} parent=5 // pred_fallthru
        _
    $region6: #{tpu_custom_call.1} parent=1 // loop_footer
      %s21 = sadd.s32 1, %s17
    $region7: #{tpu_custom_call.1} parent=1 // loop_footer_branch
      %16 = sbr.rel target = $region3
    $region8: #{tpu_custom_call.1} parent=1 // loop_exit
      _
    %472 = vsyncpa [#allocation3], 1
    %s473 = scalar_lea.sflag [#allocation3], 1
    %474 = vsyncpa %s473, 1
    %475 = vsyncpa [#allocation4], 1
    %s476 = scalar_lea.sflag [#allocation4], 1
    %477 = vsyncpa %s476, 1

</llo_original>
